<compile_context>
chip_gen: v6e
topology: v6e:2x2x1
jax: 0.10.0
libtpu: 0.0.40
codegen_flags: <defaults>
</compile_context>

<pallas_src>
import jax
import jax.numpy as jnp
from jax.experimental import pallas as pl
from jax.experimental.pallas import tpu as pltpu

GAMMA = 1.5
ALPHA = 0.25


def _make_focal_kernel(N, C, tile_n, need_mask):
    """Build the kernel with static shape / masking info baked in."""

    def kernel(pred_ref, label_ref, out_ref, acc_ref):
        i = pl.program_id(0)

        @pl.when(i == 0)
        def _():
            acc_ref[...] = jnp.zeros_like(acc_ref)

        x = pred_ref[...].astype(jnp.float32)   # logits  (tile_n, C)
        z = label_ref[...].astype(jnp.float32)  # targets (tile_n, C)

        # Shared transcendental: e = exp(-|x|)
        e = jnp.exp(-jnp.abs(x))

        # Numerically stable BCE-with-logits:
        #   max(x, 0) - x*z + log(1 + exp(-|x|))
        bce = jnp.maximum(x, 0.0) - x * z + jnp.log1p(e)

        # sigmoid(x) derived from the same e:
        #   x >= 0 : 1/(1+e)      x < 0 : e/(1+e)
        inv = 1.0 / (1.0 + e)
        p = jnp.where(x >= 0.0, inv, e * inv)

        # 1 - p_t  where  p_t = z*p + (1-z)*(1-p)
        m = z + p - 2.0 * z * p
        # (1 - p_t) ** 1.5 == m * sqrt(m), m >= 0
        modulating_factor = m * jnp.sqrt(m)

        loss = bce * modulating_factor
        # alpha > 0 branch
        loss = loss * (z * ALPHA + (1.0 - z) * (1.0 - ALPHA))

        if need_mask:
            row = (jax.lax.broadcasted_iota(jnp.int32, (tile_n, C), 0)
                   + i * tile_n)
            loss = jnp.where(row < N, loss, 0.0)

        # Per-lane f32 partial sums; defer the cross-lane reduce to the end.
        acc_ref[...] += loss

        @pl.when(i == pl.num_programs(0) - 1)
        def _():
            out_ref[0, 0] = jnp.sum(acc_ref[...]) * (1.0 / C)

    return kernel


def _choose_tile_n(N, C, itemsize, *, vmem_budget_bytes=24 * 1024 * 1024,
                   cap=1024):
    """Largest sublane-aligned row tile fitting the VMEM budget."""
    sub = {4: 8, 2: 16, 1: 32}.get(itemsize, 8)
    # Bytes per row: 2 inputs * 2 pipeline buffers * itemsize + 4B f32 scratch.
    per_row = (2 * 2 * itemsize + 4) * C
    tile_n = max(1, vmem_budget_bytes // per_row)
    n_pad = ((N + sub - 1) // sub) * sub          # no point tiling past N
    tile_n = min(tile_n, cap, n_pad)
    tile_n = max(sub, (tile_n // sub) * sub)
    return tile_n


def focal_loss(pred, label, *, tile_n=None):
    """pred, label: (N, C) float32/bfloat16.  Returns scalar float32."""
    N, C = pred.shape
    assert label.shape == (N, C)

    itemsize = jnp.dtype(pred.dtype).itemsize
    sub = {4: 8, 2: 16, 1: 32}.get(itemsize, 8)
    if tile_n is None:
        tile_n = _choose_tile_n(N, C, itemsize)
    tile_n = max(sub, (int(tile_n) // sub) * sub)

    grid_n = pl.cdiv(N, tile_n)
    need_mask = (N % tile_n) != 0

    kernel = _make_focal_kernel(N, C, tile_n, need_mask)

    out = pl.pallas_call(
        kernel,
        out_shape=jax.ShapeDtypeStruct((1, 1), jnp.float32),
        grid_spec=pltpu.PrefetchScalarGridSpec(
            num_scalar_prefetch=0,
            grid=(grid_n,),
            in_specs=[
                pl.BlockSpec((tile_n, C), lambda i: (i, 0)),
                pl.BlockSpec((tile_n, C), lambda i: (i, 0)),
            ],
            out_specs=pl.BlockSpec(
                (1, 1), lambda i: (0, 0), memory_space=pltpu.SMEM
            ),
            scratch_shapes=[pltpu.VMEM((tile_n, C), jnp.float32)],
        ),
        compiler_params=pltpu.CompilerParams(
            dimension_semantics=("arbitrary",),
            vmem_limit_bytes=32 * 1024 * 1024,
        ),
    )(pred, label)
    return out[0, 0]


def focal_loss_ref(pred, label, gamma=GAMMA, alpha=ALPHA):
    """Plain-JAX reference matching the PyTorch forward."""
    x = pred.astype(jnp.float32)
    z = label.astype(jnp.float32)
    bce = jnp.maximum(x, 0.0) - x * z + jnp.log1p(jnp.exp(-jnp.abs(x)))
    p = jax.nn.sigmoid(x)
    p_t = z * p + (1.0 - z) * (1.0 - p)
    loss = bce * (1.0 - p_t) ** gamma
    if alpha > 0:
        loss = loss * (z * alpha + (1.0 - z) * (1.0 - alpha))
    return loss.mean(axis=1).sum()


if __name__ == "__main__":
    key = jax.random.PRNGKey(0)
    k1, k2, k3, k4 = jax.random.split(key, 4)

    # Case 1: small lane-aligned shape (num_predictions, num_classes).
    N, C = 64, 128
    pred = jax.random.normal(k1, (N, C), dtype=jnp.float32) * 2.0
    label = jax.random.uniform(k2, (N, C), dtype=jnp.float32)  # soft targets
    out = jax.block_until_ready(focal_loss(pred, label))
    ref = focal_loss_ref(pred, label)
    assert jnp.allclose(out, ref, rtol=1e-5, atol=1e-5), (out, ref)

    # Case 2: N not a multiple of the tile -> exercises the row-validity mask.
    N2, C2 = 100, 128
    pred2 = jax.random.normal(k3, (N2, C2), dtype=jnp.float32) * 2.0
    label2 = (jax.random.uniform(k4, (N2, C2)) > 0.8).astype(jnp.float32)
    out2 = jax.block_until_ready(focal_loss(pred2, label2))
    ref2 = focal_loss_ref(pred2, label2)
    assert jnp.allclose(out2, ref2, rtol=1e-5, atol=1e-5), (out2, ref2)

    # Case 3: force a multi-step grid -> exercises the VMEM running accumulator.
    out3 = jax.block_until_ready(focal_loss(pred, label, tile_n=16))
    assert jnp.allclose(out3, ref, rtol=1e-5, atol=1e-5), (out3, ref)

    print("KERNEL_OK")
</pallas_src>

<mosaic_0001>
module attributes {stable_mosaic.version = 11 : i64} {
  func.func @kernel(%arg0: i32, %arg1: memref<64x128xf32, #tpu.memory_space<vmem>>, %arg2: memref<64x128xf32, #tpu.memory_space<vmem>>, %arg3: memref<1x1xf32, #tpu.memory_space<smem>>, %arg4: memref<64x128xf32, #tpu.memory_space<vmem>>) attributes {dimension_semantics = [#tpu.dimension_semantics<arbitrary>], iteration_bounds = array<i64: 1>, scalar_prefetch = 0 : i64, scratch_operands = 1 : i64, tpu.core_type = #tpu.core_type<tc>, window_params = [{transform_indices = @transform_0, window_bounds = array<i64: 64, 128>}, {transform_indices = @transform_1, window_bounds = array<i64: 64, 128>}, {transform_indices = @transform_2, window_bounds = array<i64: 1, 1>}]} {
    %c0_i32 = arith.constant 0 : i32
    %0 = arith.cmpi eq, %arg0, %c0_i32 : i32
    %1 = arith.extui %0 : i1 to i32
    %c0_i32_0 = arith.constant 0 : i32
    %2 = arith.cmpi ne, %1, %c0_i32_0 : i32
    scf.if %2 {
      %cst_18 = arith.constant 0.000000e+00 : f32
      %45 = vector.broadcast %cst_18 : f32 to vector<64x128xf32>
      %c0_19 = arith.constant 0 : index
      %c0_20 = arith.constant 0 : index
      %46 = vector.load %arg4[%c0_19, %c0_20] : memref<64x128xf32, #tpu.memory_space<vmem>>, vector<64x128xf32>
      tpu.vector_store %arg4[%c0_19, %c0_20], %45 {strides = array<i32>} : memref<64x128xf32, #tpu.memory_space<vmem>>, vector<64x128xf32>,
    } else {
    }
    %c0 = arith.constant 0 : index
    %c0_1 = arith.constant 0 : index
    %3 = vector.load %arg1[%c0, %c0_1] : memref<64x128xf32, #tpu.memory_space<vmem>>, vector<64x128xf32>
    %c0_2 = arith.constant 0 : index
    %c0_3 = arith.constant 0 : index
    %4 = vector.load %arg2[%c0_2, %c0_3] : memref<64x128xf32, #tpu.memory_space<vmem>>, vector<64x128xf32>
    %5 = math.absf %3 : vector<64x128xf32>
    %cst = arith.constant 0.000000e+00 : f32
    %6 = vector.broadcast %cst : f32 to vector<64x128xf32>
    %7 = arith.subf %6, %5 : vector<64x128xf32>
    %8 = math.exp %7 : vector<64x128xf32>
    %cst_4 = arith.constant 0.000000e+00 : f32
    %9 = vector.broadcast %cst_4 : f32 to vector<64x128xf32>
    %10 = arith.maximumf %3, %9 : vector<64x128xf32>
    %11 = arith.mulf %3, %4 : vector<64x128xf32>
    %12 = arith.subf %10, %11 : vector<64x128xf32>
    %13 = math.log1p %8 : vector<64x128xf32>
    %14 = arith.addf %12, %13 : vector<64x128xf32>
    %cst_5 = arith.constant 1.000000e+00 : f32
    %15 = vector.broadcast %cst_5 : f32 to vector<64x128xf32>
    %16 = arith.addf %15, %8 : vector<64x128xf32>
    %cst_6 = arith.constant 1.000000e+00 : f32
    %17 = vector.broadcast %cst_6 : f32 to vector<64x128xf32>
    %18 = arith.divf %17, %16 : vector<64x128xf32>
    %cst_7 = arith.constant 0.000000e+00 : f32
    %19 = vector.broadcast %cst_7 : f32 to vector<64x128xf32>
    %20 = arith.cmpf oge, %3, %19 : vector<64x128xf32>
    %21 = arith.mulf %8, %18 : vector<64x128xf32>
    %22 = arith.select %20, %18, %21 : vector<64x128xi1>, vector<64x128xf32>
    %23 = arith.addf %4, %22 : vector<64x128xf32>
    %cst_8 = arith.constant 2.000000e+00 : f32
    %24 = vector.broadcast %cst_8 : f32 to vector<64x128xf32>
    %25 = arith.mulf %24, %4 : vector<64x128xf32>
    %26 = arith.mulf %25, %22 : vector<64x128xf32>
    %27 = arith.subf %23, %26 : vector<64x128xf32>
    %28 = math.sqrt %27 : vector<64x128xf32>
    %29 = arith.mulf %27, %28 : vector<64x128xf32>
    %30 = arith.mulf %14, %29 : vector<64x128xf32>
    %cst_9 = arith.constant 2.500000e-01 : f32
    %31 = vector.broadcast %cst_9 : f32 to vector<64x128xf32>
    %32 = arith.mulf %4, %31 : vector<64x128xf32>
    %cst_10 = arith.constant 1.000000e+00 : f32
    %33 = vector.broadcast %cst_10 : f32 to vector<64x128xf32>
    %34 = arith.subf %33, %4 : vector<64x128xf32>
    %cst_11 = arith.constant 7.500000e-01 : f32
    %35 = vector.broadcast %cst_11 : f32 to vector<64x128xf32>
    %36 = arith.mulf %34, %35 : vector<64x128xf32>
    %37 = arith.addf %32, %36 : vector<64x128xf32>
    %38 = arith.mulf %30, %37 : vector<64x128xf32>
    %c0_12 = arith.constant 0 : index
    %c0_13 = arith.constant 0 : index
    %39 = vector.load %arg4[%c0_12, %c0_13] : memref<64x128xf32, #tpu.memory_space<vmem>>, vector<64x128xf32>
    %40 = arith.addf %39, %38 : vector<64x128xf32>
    %c0_14 = arith.constant 0 : index
    %c0_15 = arith.constant 0 : index
    %41 = vector.load %arg4[%c0_14, %c0_15] : memref<64x128xf32, #tpu.memory_space<vmem>>, vector<64x128xf32>
    tpu.vector_store %arg4[%c0_14, %c0_15], %40 {strides = array<i32>} : memref<64x128xf32, #tpu.memory_space<vmem>>, vector<64x128xf32>,
    %c0_i32_16 = arith.constant 0 : i32
    %42 = arith.cmpi eq, %arg0, %c0_i32_16 : i32
    %43 = arith.extui %42 : i1 to i32
    %c0_i32_17 = arith.constant 0 : i32
    %44 = arith.cmpi ne, %43, %c0_i32_17 : i32
    scf.if %44 {
      %c0_18 = arith.constant 0 : index
      %c0_19 = arith.constant 0 : index
      %45 = vector.load %arg4[%c0_18, %c0_19] : memref<64x128xf32, #tpu.memory_space<vmem>>, vector<64x128xf32>
      %46 = vector.shape_cast %45 : vector<64x128xf32> to vector<1x64x128xf32>
      %cst_20 = arith.constant dense<0.000000e+00> : vector<1xf32>
      %47 = vector.multi_reduction <add>, %46, %cst_20 [1, 2] : vector<1x64x128xf32> to vector<1xf32>
      %48 = vector.shape_cast %47 : vector<1xf32> to vector<1x1x1xf32>
      %49 = vector.extract %48[0, 0, 0] : f32 from vector<1x1x1xf32>
      %cst_21 = arith.constant 7.812500e-03 : f32
      %50 = arith.mulf %49, %cst_21 : f32
      %c0_22 = arith.constant 0 : index
      %c0_23 = arith.constant 0 : index
      %51 = memref.load %arg3[%c0_22, %c0_23] : memref<1x1xf32, #tpu.memory_space<smem>>
      memref.store %50, %arg3[%c0_22, %c0_23] : memref<1x1xf32, #tpu.memory_space<smem>>
    } else {
    }
    return
  }
  func.func @transform_0(%arg0: i32) -> (i32, i32) {
    %c0_i32 = arith.constant 0 : i32
    %c0_i32_0 = arith.constant 0 : i32
    return %arg0, %c0_i32 : i32, i32
  }
  func.func @transform_1(%arg0: i32) -> (i32, i32) {
    %c0_i32 = arith.constant 0 : i32
    %c0_i32_0 = arith.constant 0 : i32
    return %arg0, %c0_i32 : i32, i32
  }
  func.func @transform_2(%arg0: i32) -> (i32, i32) {
    %c0_i32 = arith.constant 0 : i32
    %c0_i32_0 = arith.constant 0 : i32
    %c0_i32_1 = arith.constant 0 : i32
    return %c0_i32, %c0_i32_0 : i32, i32
  }
}

</mosaic_0001>

<llo_original>
// kernel: tpu_custom_call.1
$region0: #{tpu_custom_call.1}
  #allocation0 [shape = 'u32[]', space=smem, size = 0x4, offset = 0x4, fixed_abs, tag = 'smem constant byte address 0x4 - core index']
  #allocation1 [shape = 'u32[144,128]{1,0:T(1,128)}', space=vmem, size = 0x12000, scoped, tag = 'internal scratch']
  #allocation2 [shape = 'f32[64,128]{1,0:T(8,128)}', space=vmem, size = 0x8000, scoped, tag = 'scratch operand']
  %s0 = inlined_call_operand.hbm [shape: f32[64,128], index: 0, kind: input, shape index: {}]
  %s1 = inlined_call_operand.hbm [shape: f32[64,128], index: 1, kind: input, shape index: {}]
  %s2 = inlined_call_operand.hbm [shape: f32[1,1], index: 2, kind: output, shape index: {}]
  %s3 = sld [smem:[#allocation0]]
  $region34: #{tpu_custom_call.1} parent=0
    _
  %s5 = ssub.s32 1, %s3
  %s6 = scalar_select 0, %s5, %s3
  $region1: #{tpu_custom_call.1} parent=0
    #allocation3 [shape = 'u8[32768]{0}', space=vmem, size = 0x8000, scoped, tag = 'input window, operand 0, single buffered']
    #allocation4 [shape = 's32[1]{0}', space=sflag, size = 0x4, scoped, tag = 'scoped memory for tpu_custom_call.1']
    #allocation5 [shape = 's32[1]{0}', space=sflag, size = 0x4, scoped, tag = 'scoped memory for tpu_custom_call.1']
    #allocation6 [shape = 'u8[32768]{0}', space=vmem, size = 0x8000, scoped, tag = 'input window, operand 1, single buffered']
    #allocation7 [shape = 's32[1]{0}', space=sflag, size = 0x4, scoped, tag = 'scoped memory for tpu_custom_call.1']
    #allocation8 [shape = 'u8[512]{0}', space=smem, size = 0x200, scoped, tag = 'output window, operand 0, single buffered']
    %7 = vsyncpa [#allocation4], 0
    %8 = vsyncpa [#allocation7], 0
    %9 = vsyncpa [#allocation5], 0
    // Predicated region
    $region2: #{tpu_custom_call.1} parent=1 // pred_check
      _
    $region3: #{tpu_custom_call.1} parent=1 // pred_check_branch
      %11 = sbr.rel (0) target = $region5
    $region4: #{tpu_custom_call.1} parent=1 // pred_region
      %s13 = ssub.s32 1024, 1024
      %14 = vsyncadd [#allocation4], %s13
      %s15 = sshll.u32 [#allocation3], 4
      %s16 = int_to_ptr.vmem [resolvable:$true] %s15
      %21 = dma.hbm_to_vmem [thread:$0]  %s0, 1024, %s16, [#allocation4], 128, 128, 8
    $region5: #{tpu_custom_call.1} parent=1 // pred_fallthru
      _
    // Predicated region
    $region6: #{tpu_custom_call.1} parent=1 // pred_check
      _
    $region7: #{tpu_custom_call.1} parent=1 // pred_check_branch
      %23 = sbr.rel (0) target = $region9
    $region8: #{tpu_custom_call.1} parent=1 // pred_region
      %s25 = ssub.s32 1024, 1024
      %26 = vsyncadd [#allocation7], %s25
      %s27 = sshll.u32 [#allocation6], 4
      %s28 = int_to_ptr.vmem [resolvable:$true] %s27
      %33 = dma.hbm_to_vmem [thread:$0]  %s1, 1024, %s28, [#allocation7], 128, 128, 8
    $region9: #{tpu_custom_call.1} parent=1 // pred_fallthru
      _
    // Predicated region
    $region10: #{tpu_custom_call.1} parent=1 // pred_check
      _
    $region11: #{tpu_custom_call.1} parent=1 // pred_check_branch
      %35 = sbr.rel (0) target = $region13
    $region12: #{tpu_custom_call.1} parent=1 // pred_region
      %36 = dma.done [#allocation4], 1024
    $region13: #{tpu_custom_call.1} parent=1 // pred_fallthru
      _
    // Predicated region
    $region14: #{tpu_custom_call.1} parent=1 // pred_check
      _
    $region15: #{tpu_custom_call.1} parent=1 // pred_check_branch
      %38 = sbr.rel (0) target = $region17
    $region16: #{tpu_custom_call.1} parent=1 // pred_region
      %39 = dma.done [#allocation7], 1024
    $region17: #{tpu_custom_call.1} parent=1 // pred_fallthru
      _
    %p40 = scmp.eq.s32.totalorder 0, 0
    // Predicated region
    $region18: #{tpu_custom_call.1} parent=1 // pred_check
      %p41 = pneg %p40
    $region19: #{tpu_custom_call.1} parent=1 // pred_check_branch
      %43 = sbr.rel (%p41) target = $region21
    $region20: #{tpu_custom_call.1} parent=1 // pred_region
      %44 = vst [vmem:[#allocation2] sm:$0xff] 0.0
      %45 = vst [vmem:[#allocation2 + $0x8] sm:$0xff] 0.0
      %46 = vst [vmem:[#allocation2 + $0x10] sm:$0xff] 0.0
      %47 = vst [vmem:[#allocation2 + $0x18] sm:$0xff] 0.0
      %48 = vst [vmem:[#allocation2 + $0x20] sm:$0xff] 0.0
      %49 = vst [vmem:[#allocation2 + $0x28] sm:$0xff] 0.0
      %50 = vst [vmem:[#allocation2 + $0x30] sm:$0xff] 0.0
      %51 = vst [vmem:[#allocation2 + $0x38] sm:$0xff] 0.0
    $region21: #{tpu_custom_call.1} parent=1 // pred_fallthru
      _
    %v52 = vld [vmem:[#allocation3] sm:$0xff]
    %v53 = vld [vmem:[#allocation3 + $0x8] sm:$0xff]
    %v54 = vld [vmem:[#allocation3 + $0x10] sm:$0xff]
    %v55 = vld [vmem:[#allocation3 + $0x18] sm:$0xff]
    %v56 = vld [vmem:[#allocation3 + $0x20] sm:$0xff]
    %v57 = vld [vmem:[#allocation3 + $0x28] sm:$0xff]
    %v58 = vld [vmem:[#allocation3 + $0x30] sm:$0xff]
    %v59 = vld [vmem:[#allocation3 + $0x38] sm:$0xff]
    %v60 = vld [vmem:[#allocation6] sm:$0xff]
    %v61 = vld [vmem:[#allocation6 + $0x8] sm:$0xff]
    %v62 = vld [vmem:[#allocation6 + $0x10] sm:$0xff]
    %v63 = vld [vmem:[#allocation6 + $0x18] sm:$0xff]
    %v64 = vld [vmem:[#allocation6 + $0x20] sm:$0xff]
    %v65 = vld [vmem:[#allocation6 + $0x28] sm:$0xff]
    %v66 = vld [vmem:[#allocation6 + $0x30] sm:$0xff]
    %v67 = vld [vmem:[#allocation6 + $0x38] sm:$0xff]
    %v68 = vand.u32 2147483647, %v52
    %v69 = vand.u32 2147483647, %v53
    %v70 = vand.u32 2147483647, %v54
    %v71 = vand.u32 2147483647, %v55
    %v72 = vand.u32 2147483647, %v56
    %v73 = vand.u32 2147483647, %v57
    %v74 = vand.u32 2147483647, %v58
    %v75 = vand.u32 2147483647, %v59
    %v76 = vsub.f32 0.0, %v68
    %v77 = vsub.f32 0.0, %v69
    %v78 = vsub.f32 0.0, %v70
    %v79 = vsub.f32 0.0, %v71
    %v80 = vsub.f32 0.0, %v72
    %v81 = vsub.f32 0.0, %v73
    %v82 = vsub.f32 0.0, %v74
    %v83 = vsub.f32 0.0, %v75
    %v84 = vmul.f32 %v76, 1.442695
    %v85 = vpow.pop %v84
    %v86 = vmul.f32 %v77, 1.442695
    %v87 = vpow.pop %v86
    %v88 = vmul.f32 %v78, 1.442695
    %v89 = vpow.pop %v88
    %v90 = vmul.f32 %v79, 1.442695
    %v91 = vpow.pop %v90
    %v92 = vmul.f32 %v80, 1.442695
    %v93 = vpow.pop %v92
    %v94 = vmul.f32 %v81, 1.442695
    %v95 = vpow.pop %v94
    %v96 = vmul.f32 %v82, 1.442695
    %v97 = vpow.pop %v96
    %v98 = vmul.f32 %v83, 1.442695
    %v99 = vpow.pop %v98
    %v100 = vmax.f32 %v52, 0.0
    %v101 = vmax.f32 %v53, 0.0
    %v102 = vmax.f32 %v54, 0.0
    %v103 = vmax.f32 %v55, 0.0
    %v104 = vmax.f32 %v56, 0.0
    %v105 = vmax.f32 %v57, 0.0
    %v106 = vmax.f32 %v58, 0.0
    %v107 = vmax.f32 %v59, 0.0
    %v108 = vmul.f32 %v52, %v60
    %v109 = vmul.f32 %v53, %v61
    %v110 = vmul.f32 %v54, %v62
    %v111 = vmul.f32 %v55, %v63
    %v112 = vmul.f32 %v56, %v64
    %v113 = vmul.f32 %v57, %v65
    %v114 = vmul.f32 %v58, %v66
    %v115 = vmul.f32 %v59, %v67
    %v116 = vsub.f32 %v100, %v108
    %v117 = vsub.f32 %v101, %v109
    %v118 = vsub.f32 %v102, %v110
    %v119 = vsub.f32 %v103, %v111
    %v120 = vsub.f32 %v104, %v112
    %v121 = vsub.f32 %v105, %v113
    %v122 = vsub.f32 %v106, %v114
    %v123 = vsub.f32 %v107, %v115
    %v124 = vadd.f32 %v85, 1.0
    %v125 = vlog2.pop %v124
    %v126 = vmul.f32 %v125, 0.6931472
    %v127 = vmul.f32 -0.5, %v85
    %v128 = vadd.f32 %v127, 1.0
    %v129 = vmul.f32 %v128, %v85
    %v130 = vand.u32 2147483647, %v85
    %vm131 = vcmp.lt.f32.partialorder %v130, 0.0004427343
    %v132 = vsel %vm131, %v129, %v126
    %v133 = vadd.f32 %v87, 1.0
    %v134 = vlog2.pop %v133
    %v135 = vmul.f32 %v134, 0.6931472
    %v136 = vmul.f32 -0.5, %v87
    %v137 = vadd.f32 %v136, 1.0
    %v138 = vmul.f32 %v137, %v87
    %v139 = vand.u32 2147483647, %v87
    %vm140 = vcmp.lt.f32.partialorder %v139, 0.0004427343
    %v141 = vsel %vm140, %v138, %v135
    %v142 = vadd.f32 %v89, 1.0
    %v143 = vlog2.pop %v142
    %v144 = vmul.f32 %v143, 0.6931472
    %v145 = vmul.f32 -0.5, %v89
    %v146 = vadd.f32 %v145, 1.0
    %v147 = vmul.f32 %v146, %v89
    %v148 = vand.u32 2147483647, %v89
    %vm149 = vcmp.lt.f32.partialorder %v148, 0.0004427343
    %v150 = vsel %vm149, %v147, %v144
    %v151 = vadd.f32 %v91, 1.0
    %v152 = vlog2.pop %v151
    %v153 = vmul.f32 %v152, 0.6931472
    %v154 = vmul.f32 -0.5, %v91
    %v155 = vadd.f32 %v154, 1.0
    %v156 = vmul.f32 %v155, %v91
    %v157 = vand.u32 2147483647, %v91
    %vm158 = vcmp.lt.f32.partialorder %v157, 0.0004427343
    %v159 = vsel %vm158, %v156, %v153
    %v160 = vadd.f32 %v93, 1.0
    %v161 = vlog2.pop %v160
    %v162 = vmul.f32 %v161, 0.6931472
    %v163 = vmul.f32 -0.5, %v93
    %v164 = vadd.f32 %v163, 1.0
    %v165 = vmul.f32 %v164, %v93
    %v166 = vand.u32 2147483647, %v93
    %vm167 = vcmp.lt.f32.partialorder %v166, 0.0004427343
    %v168 = vsel %vm167, %v165, %v162
    %v169 = vadd.f32 %v95, 1.0
    %v170 = vlog2.pop %v169
    %v171 = vmul.f32 %v170, 0.6931472
    %v172 = vmul.f32 -0.5, %v95
    %v173 = vadd.f32 %v172, 1.0
    %v174 = vmul.f32 %v173, %v95
    %v175 = vand.u32 2147483647, %v95
    %vm176 = vcmp.lt.f32.partialorder %v175, 0.0004427343
    %v177 = vsel %vm176, %v174, %v171
    %v178 = vadd.f32 %v97, 1.0
    %v179 = vlog2.pop %v178
    %v180 = vmul.f32 %v179, 0.6931472
    %v181 = vmul.f32 -0.5, %v97
    %v182 = vadd.f32 %v181, 1.0
    %v183 = vmul.f32 %v182, %v97
    %v184 = vand.u32 2147483647, %v97
    %vm185 = vcmp.lt.f32.partialorder %v184, 0.0004427343
    %v186 = vsel %vm185, %v183, %v180
    %v187 = vadd.f32 %v99, 1.0
    %v188 = vlog2.pop %v187
    %v189 = vmul.f32 %v188, 0.6931472
    %v190 = vmul.f32 -0.5, %v99
    %v191 = vadd.f32 %v190, 1.0
    %v192 = vmul.f32 %v191, %v99
    %v193 = vand.u32 2147483647, %v99
    %vm194 = vcmp.lt.f32.partialorder %v193, 0.0004427343
    %v195 = vsel %vm194, %v192, %v189
    %v196 = vadd.f32 %v116, %v132
    %v197 = vadd.f32 %v117, %v141
    %v198 = vadd.f32 %v118, %v150
    %v199 = vadd.f32 %v119, %v159
    %v200 = vadd.f32 %v120, %v168
    %v201 = vadd.f32 %v121, %v177
    %v202 = vadd.f32 %v122, %v186
    %v203 = vadd.f32 %v123, %v195
    %v204 = vadd.f32 %v85, 1.0
    %v205 = vadd.f32 %v87, 1.0
    %v206 = vadd.f32 %v89, 1.0
    %v207 = vadd.f32 %v91, 1.0
    %v208 = vadd.f32 %v93, 1.0
    %v209 = vadd.f32 %v95, 1.0
    %v210 = vadd.f32 %v97, 1.0
    %v211 = vadd.f32 %v99, 1.0
    %v212 = vrcp.pop %v204
    %v213 = vmul.f32 1.0, %v212
    %v214 = vrcp.pop %v205
    %v215 = vmul.f32 1.0, %v214
    %v216 = vrcp.pop %v206
    %v217 = vmul.f32 1.0, %v216
    %v218 = vrcp.pop %v207
    %v219 = vmul.f32 1.0, %v218
    %v220 = vrcp.pop %v208
    %v221 = vmul.f32 1.0, %v220
    %v222 = vrcp.pop %v209
    %v223 = vmul.f32 1.0, %v222
    %v224 = vrcp.pop %v210
    %v225 = vmul.f32 1.0, %v224
    %v226 = vrcp.pop %v211
    %v227 = vmul.f32 1.0, %v226
    %vm228 = vcmp.ge.f32.partialorder %v52, 0.0
    %vm229 = vcmp.ge.f32.partialorder %v53, 0.0
    %vm230 = vcmp.ge.f32.partialorder %v54, 0.0
    %vm231 = vcmp.ge.f32.partialorder %v55, 0.0
    %vm232 = vcmp.ge.f32.partialorder %v56, 0.0
    %vm233 = vcmp.ge.f32.partialorder %v57, 0.0
    %vm234 = vcmp.ge.f32.partialorder %v58, 0.0
    %vm235 = vcmp.ge.f32.partialorder %v59, 0.0
    %v236 = vmul.f32 %v85, %v213
    %v237 = vmul.f32 %v87, %v215
    %v238 = vmul.f32 %v89, %v217
    %v239 = vmul.f32 %v91, %v219
    %v240 = vmul.f32 %v93, %v221
    %v241 = vmul.f32 %v95, %v223
    %v242 = vmul.f32 %v97, %v225
    %v243 = vmul.f32 %v99, %v227
    %v244 = vsel %vm228, %v213, %v236
    %v245 = vsel %vm229, %v215, %v237
    %v246 = vsel %vm230, %v217, %v238
    %v247 = vsel %vm231, %v219, %v239
    %v248 = vsel %vm232, %v221, %v240
    %v249 = vsel %vm233, %v223, %v241
    %v250 = vsel %vm234, %v225, %v242
    %v251 = vsel %vm235, %v227, %v243
    %v252 = vadd.f32 %v60, %v244
    %v253 = vadd.f32 %v61, %v245
    %v254 = vadd.f32 %v62, %v246
    %v255 = vadd.f32 %v63, %v247
    %v256 = vadd.f32 %v64, %v248
    %v257 = vadd.f32 %v65, %v249
    %v258 = vadd.f32 %v66, %v250
    %v259 = vadd.f32 %v67, %v251
    %v260 = vmul.f32 %v60, 2.0
    %v261 = vmul.f32 %v61, 2.0
    %v262 = vmul.f32 %v62, 2.0
    %v263 = vmul.f32 %v63, 2.0
    %v264 = vmul.f32 %v64, 2.0
    %v265 = vmul.f32 %v65, 2.0
    %v266 = vmul.f32 %v66, 2.0
    %v267 = vmul.f32 %v67, 2.0
    %v268 = vmul.f32 %v260, %v244
    %v269 = vmul.f32 %v261, %v245
    %v270 = vmul.f32 %v262, %v246
    %v271 = vmul.f32 %v263, %v247
    %v272 = vmul.f32 %v264, %v248
    %v273 = vmul.f32 %v265, %v249
    %v274 = vmul.f32 %v266, %v250
    %v275 = vmul.f32 %v267, %v251
    %v276 = vsub.f32 %v252, %v268
    %v277 = vsub.f32 %v253, %v269
    %v278 = vsub.f32 %v254, %v270
    %v279 = vsub.f32 %v255, %v271
    %v280 = vsub.f32 %v256, %v272
    %v281 = vsub.f32 %v257, %v273
    %v282 = vsub.f32 %v258, %v274
    %v283 = vsub.f32 %v259, %v275
    %v284 = vrsqrt.pop %v276
    %v285 = vmul.f32 %v276, %v284
    %vm286 = vcmp.eq.f32.partialorder %v276, inf
    %v287 = vsel %vm286, %v276, %v285
    %vm288 = vcmp.eq.f32.partialorder %v276, 0.0
    %v289 = vand.u32 %v276, 2147483648
    %v290 = vsel %vm288, %v289, %v287
    %v291 = vrsqrt.pop %v277
    %v292 = vmul.f32 %v277, %v291
    %vm293 = vcmp.eq.f32.partialorder %v277, inf
    %v294 = vsel %vm293, %v277, %v292
    %vm295 = vcmp.eq.f32.partialorder %v277, 0.0
    %v296 = vand.u32 %v277, 2147483648
    %v297 = vsel %vm295, %v296, %v294
    %v298 = vrsqrt.pop %v278
    %v299 = vmul.f32 %v278, %v298
    %vm300 = vcmp.eq.f32.partialorder %v278, inf
    %v301 = vsel %vm300, %v278, %v299
    %vm302 = vcmp.eq.f32.partialorder %v278, 0.0
    %v303 = vand.u32 %v278, 2147483648
    %v304 = vsel %vm302, %v303, %v301
    %v305 = vrsqrt.pop %v279
    %v306 = vmul.f32 %v279, %v305
    %vm307 = vcmp.eq.f32.partialorder %v279, inf
    %v308 = vsel %vm307, %v279, %v306
    %vm309 = vcmp.eq.f32.partialorder %v279, 0.0
    %v310 = vand.u32 %v279, 2147483648
    %v311 = vsel %vm309, %v310, %v308
    %v312 = vrsqrt.pop %v280
    %v313 = vmul.f32 %v280, %v312
    %vm314 = vcmp.eq.f32.partialorder %v280, inf
    %v315 = vsel %vm314, %v280, %v313
    %vm316 = vcmp.eq.f32.partialorder %v280, 0.0
    %v317 = vand.u32 %v280, 2147483648
    %v318 = vsel %vm316, %v317, %v315
    %v319 = vrsqrt.pop %v281
    %v320 = vmul.f32 %v281, %v319
    %vm321 = vcmp.eq.f32.partialorder %v281, inf
    %v322 = vsel %vm321, %v281, %v320
    %vm323 = vcmp.eq.f32.partialorder %v281, 0.0
    %v324 = vand.u32 %v281, 2147483648
    %v325 = vsel %vm323, %v324, %v322
    %v326 = vrsqrt.pop %v282
    %v327 = vmul.f32 %v282, %v326
    %vm328 = vcmp.eq.f32.partialorder %v282, inf
    %v329 = vsel %vm328, %v282, %v327
    %vm330 = vcmp.eq.f32.partialorder %v282, 0.0
    %v331 = vand.u32 %v282, 2147483648
    %v332 = vsel %vm330, %v331, %v329
    %v333 = vrsqrt.pop %v283
    %v334 = vmul.f32 %v283, %v333
    %vm335 = vcmp.eq.f32.partialorder %v283, inf
    %v336 = vsel %vm335, %v283, %v334
    %vm337 = vcmp.eq.f32.partialorder %v283, 0.0
    %v338 = vand.u32 %v283, 2147483648
    %v339 = vsel %vm337, %v338, %v336
    %v340 = vmul.f32 %v276, %v290
    %v341 = vmul.f32 %v277, %v297
    %v342 = vmul.f32 %v278, %v304
    %v343 = vmul.f32 %v279, %v311
    %v344 = vmul.f32 %v280, %v318
    %v345 = vmul.f32 %v281, %v325
    %v346 = vmul.f32 %v282, %v332
    %v347 = vmul.f32 %v283, %v339
    %v348 = vmul.f32 %v196, %v340
    %v349 = vmul.f32 %v197, %v341
    %v350 = vmul.f32 %v198, %v342
    %v351 = vmul.f32 %v199, %v343
    %v352 = vmul.f32 %v200, %v344
    %v353 = vmul.f32 %v201, %v345
    %v354 = vmul.f32 %v202, %v346
    %v355 = vmul.f32 %v203, %v347
    %v356 = vmul.f32 %v60, 0.25
    %v357 = vmul.f32 %v61, 0.25
    %v358 = vmul.f32 %v62, 0.25
    %v359 = vmul.f32 %v63, 0.25
    %v360 = vmul.f32 %v64, 0.25
    %v361 = vmul.f32 %v65, 0.25
    %v362 = vmul.f32 %v66, 0.25
    %v363 = vmul.f32 %v67, 0.25
    %v364 = vsub.f32 1.0, %v60
    %v365 = vsub.f32 1.0, %v61
    %v366 = vsub.f32 1.0, %v62
    %v367 = vsub.f32 1.0, %v63
    %v368 = vsub.f32 1.0, %v64
    %v369 = vsub.f32 1.0, %v65
    %v370 = vsub.f32 1.0, %v66
    %v371 = vsub.f32 1.0, %v67
    %v372 = vmul.f32 %v364, 0.75
    %v373 = vmul.f32 %v365, 0.75
    %v374 = vmul.f32 %v366, 0.75
    %v375 = vmul.f32 %v367, 0.75
    %v376 = vmul.f32 %v368, 0.75
    %v377 = vmul.f32 %v369, 0.75
    %v378 = vmul.f32 %v370, 0.75
    %v379 = vmul.f32 %v371, 0.75
    %v380 = vadd.f32 %v356, %v372
    %v381 = vadd.f32 %v357, %v373
    %v382 = vadd.f32 %v358, %v374
    %v383 = vadd.f32 %v359, %v375
    %v384 = vadd.f32 %v360, %v376
    %v385 = vadd.f32 %v361, %v377
    %v386 = vadd.f32 %v362, %v378
    %v387 = vadd.f32 %v363, %v379
    %v388 = vmul.f32 %v348, %v380
    %v389 = vmul.f32 %v349, %v381
    %v390 = vmul.f32 %v350, %v382
    %v391 = vmul.f32 %v351, %v383
    %v392 = vmul.f32 %v352, %v384
    %v393 = vmul.f32 %v353, %v385
    %v394 = vmul.f32 %v354, %v386
    %v395 = vmul.f32 %v355, %v387
    %v396 = vld [vmem:[#allocation2] sm:$0xff]
    %v397 = vld [vmem:[#allocation2 + $0x8] sm:$0xff]
    %v398 = vld [vmem:[#allocation2 + $0x10] sm:$0xff]
    %v399 = vld [vmem:[#allocation2 + $0x18] sm:$0xff]
    %v400 = vld [vmem:[#allocation2 + $0x20] sm:$0xff]
    %v401 = vld [vmem:[#allocation2 + $0x28] sm:$0xff]
    %v402 = vld [vmem:[#allocation2 + $0x30] sm:$0xff]
    %v403 = vld [vmem:[#allocation2 + $0x38] sm:$0xff]
    %v404 = vadd.f32 %v396, %v388
    %v405 = vadd.f32 %v397, %v389
    %v406 = vadd.f32 %v398, %v390
    %v407 = vadd.f32 %v399, %v391
    %v408 = vadd.f32 %v400, %v392
    %v409 = vadd.f32 %v401, %v393
    %v410 = vadd.f32 %v402, %v394
    %v411 = vadd.f32 %v403, %v395
    %412 = vst [vmem:[#allocation2] sm:$0xff] %v404
    %413 = vst [vmem:[#allocation2 + $0x8] sm:$0xff] %v405
    %414 = vst [vmem:[#allocation2 + $0x10] sm:$0xff] %v406
    %415 = vst [vmem:[#allocation2 + $0x18] sm:$0xff] %v407
    %416 = vst [vmem:[#allocation2 + $0x20] sm:$0xff] %v408
    %417 = vst [vmem:[#allocation2 + $0x28] sm:$0xff] %v409
    %418 = vst [vmem:[#allocation2 + $0x30] sm:$0xff] %v410
    %419 = vst [vmem:[#allocation2 + $0x38] sm:$0xff] %v411
    // Predicated region
    $region22: #{tpu_custom_call.1} parent=1 // pred_check
      %p420 = pneg %p40
    $region23: #{tpu_custom_call.1} parent=1 // pred_check_branch
      %422 = sbr.rel (%p420) target = $region25
    $region24: #{tpu_custom_call.1} parent=1 // pred_region
      %v423 = vld [vmem:[#allocation2] sm:$0xff]
      %v424 = vld [vmem:[#allocation2 + $0x8] sm:$0xff]
      %v425 = vld [vmem:[#allocation2 + $0x10] sm:$0xff]
      %v426 = vld [vmem:[#allocation2 + $0x18] sm:$0xff]
      %v427 = vld [vmem:[#allocation2 + $0x20] sm:$0xff]
      %v428 = vld [vmem:[#allocation2 + $0x28] sm:$0xff]
      %v429 = vld [vmem:[#allocation2 + $0x30] sm:$0xff]
      %v430 = vld [vmem:[#allocation2 + $0x38] sm:$0xff]
      %v431 = vadd.f32 %v423, %v424
      %v432 = vadd.f32 %v431, %v425
      %v433 = vadd.f32 %v432, %v426
      %v434 = vadd.f32 %v433, %v427
      %v435 = vadd.f32 %v434, %v428
      %v436 = vadd.f32 %v435, %v429
      %v437 = vadd.f32 %v436, %v430
      %438 = vadd.xlane.f32.xlu0 %v437
      %v439 = vpop.xlane.xlu0 %438
      %v440 = vrot.slane %v439, 4
      %v441 = vadd.f32 %v439, %v440
      %v442 = vrot.slane %v441, 2
      %v443 = vadd.f32 %v441, %v442
      %v444 = vrot.slane %v443, 1
      %v445 = vadd.f32 %v443, %v444
      %s446 = vtos %v445
      %s447 = smul.f32 %s446, 0.0078125
      %s448 = scalar_lea.smem [#allocation8], 0
      %449 = sst [smem:[%s448]] %s447
    $region25: #{tpu_custom_call.1} parent=1 // pred_fallthru
      _
    // Predicated region
    $region26: #{tpu_custom_call.1} parent=1 // pred_check
      _
    $region27: #{tpu_custom_call.1} parent=1 // pred_check_branch
      %451 = sbr.rel (0) target = $region29
    $region28: #{tpu_custom_call.1} parent=1 // pred_region
      %s453 = ssub.s32 16, 16
      %454 = vsyncadd [#allocation5], %s453
      %457 = dma.smem_to_hbm [#allocation8], 16, %s2, [#allocation5]
    $region29: #{tpu_custom_call.1} parent=1 // pred_fallthru
      _
    // Predicated region
    $region30: #{tpu_custom_call.1} parent=1 // pred_check
      _
    $region31: #{tpu_custom_call.1} parent=1 // pred_check_branch
      %459 = sbr.rel (0) target = $region33
    $region32: #{tpu_custom_call.1} parent=1 // pred_region
      %460 = dma.done [#allocation5], 16
    $region33: #{tpu_custom_call.1} parent=1 // pred_fallthru
      _
    %461 = sfence
    %462 = vsyncpa [#allocation4], 1
    %463 = vsyncpa [#allocation7], 1
    %464 = vsyncpa [#allocation5], 1

</llo_original>
